<compile_context>
chip_gen: v6e
topology: v6e:2x2x1
jax: 0.10.0
libtpu: 0.0.40
codegen_flags: <defaults>
</compile_context>

<pallas_src>
import jax
import jax.numpy as jnp
from jax import lax
from jax.experimental import pallas as pl
from jax.experimental.pallas import tpu as pltpu

LANES = 128
SUBLANES = 8
# Below this many bytes per operand a fused jnp.mean beats the pallas_call launch cost.
_FAST_PATH_BYTES = 512 * 1024
_MAX_CHUNK_ROWS = 4096  # 2 MiB/input block -> 8 MiB double-buffered, fits v5e's 16 MiB scoped VMEM.


def _cdiv(a, b):
    return -(-a // b)


def _round_up(x, m):
    return ((x + m - 1) // m) * m


def _default_num_slices():
    """Leading 'parallel' grid size: 2 on dual-TensorCore chips (v7x-class), else 1."""
    # TODO(synk): replace the device_kind sniff with a supported TensorCore-count query.
    try:
        kind = jax.devices()[0].device_kind.lower()
    except Exception:
        return 1
    return 2 if ("v7" in kind or "7x" in kind) else 1


def _mse_partial_kernel(nvalid_ref, pred_ref, gt_ref, out_ref):
    """Accumulate masked sum((pred-gt)^2) for this slice into a vreg-shaped partial.

    nvalid_ref: (1,) int32 SMEM (scalar prefetch) -- true element count N.
    pred_ref/gt_ref: (chunk_rows, 128) VMEM input blocks.
    out_ref: (acc_rows, 128) f32 VMEM output block, resident across the inner
             ("arbitrary") grid axis -> used directly as the accumulator.
    """
    c = pl.program_id(0)          # parallel slice (TensorCore on v7x)
    k = pl.program_id(1)          # reduction step within the slice
    chunk_rows = pred_ref.shape[0]
    acc_rows = out_ref.shape[0]

    @pl.when(k == 0)
    def _init():
        out_ref[...] = jnp.zeros_like(out_ref)

    # Global flat element index of every (row, lane) position of this (nominal) block.
    # Out-of-range positions (lane padding, boundary-block garbage, clamped dead blocks)
    # are zeroed before squaring, so they contribute exactly 0 to the sum.
    row0 = (c * pl.num_programs(1) + k) * chunk_rows
    r = lax.broadcasted_iota(jnp.int32, (chunk_rows, LANES), 0)
    col = lax.broadcasted_iota(jnp.int32, (chunk_rows, LANES), 1)
    flat = (row0 + r) * LANES + col
    valid = flat < nvalid_ref[0]

    d = pred_ref[...].astype(jnp.float32) - gt_ref[...].astype(jnp.float32)
    d = jnp.where(valid, d, jnp.float32(0.0))
    d2 = d * d
    # Fold sublane groups together with VPU adds only (no XLU, no scalar RMW in the
    # hot loop); the final scalar reduce happens once in the wrapper.
    out_ref[...] += jnp.sum(d2.reshape(-1, acc_rows, LANES), axis=0)


def reg_loss(pred, gt, *, chunk_rows=2048, num_slices=None, force_pallas=False):
    """MSE loss matching PyTorch reg_loss.forward.

    pred: shape (B,) or (B, 1); gt: shape (B,). Returns a scalar float32.
    """
    if pred.ndim > gt.ndim:
        pred = jnp.squeeze(pred, axis=1)
    assert pred.shape == gt.shape, "pred and gt must have the same shape after squeeze"
    B = pred.shape[0]
    if B == 0:
        return jnp.float32(jnp.nan)  # matches torch MSELoss on empty input

    ip = jnp.dtype(pred.dtype).itemsize
    ig = jnp.dtype(gt.dtype).itemsize

    if not force_pallas and B * max(ip, ig) <= _FAST_PATH_BYTES:
        # Small operands: a pallas_call is pure launch/prologue overhead; let XLA fuse.
        d = pred.astype(jnp.float32) - gt.astype(jnp.float32)
        return jnp.mean(d * d)

    # ---- shape / tiling bookkeeping (all Python ints, no traced control flow) ----
    rows = _cdiv(B, LANES)
    total = rows * LANES
    pred_f, gt_f = pred, gt
    if total != B:
        # TODO(synk): this minimal lane-alignment pad still copies the inputs once;
        # only hit when B is not a multiple of 128 (the in-kernel mask handles the tail).
        pred_f = jnp.pad(pred_f, (0, total - B))
        gt_f = jnp.pad(gt_f, (0, total - B))
    pred2d = pred_f.reshape(rows, LANES)   # free bitcast for contiguous 1-D
    gt2d = gt_f.reshape(rows, LANES)

    # 16-bit inputs need a (16, 128) minimum tile; 32-bit needs (8, 128).
    min_rows = SUBLANES * max(1, 4 // max(1, min(ip, ig)))

    chunk_rows = int(max(min_rows, min(int(chunk_rows), _MAX_CHUNK_ROWS)))
    chunk_rows = _round_up(chunk_rows, min_rows)
    if rows >= min_rows:
        chunk_rows_eff = min(chunk_rows, (rows // min_rows) * min_rows)
    else:
        chunk_rows_eff = rows              # block == full (tiny) array

    if num_slices is None:
        num_slices = _default_num_slices()
    if chunk_rows_eff % SUBLANES == 0:
        acc_rows = SUBLANES                # (8, 128) vreg-shaped partial per slice
    else:
        acc_rows = chunk_rows_eff          # tiny array: partial == block shape
        num_slices = 1

    chunks_total = _cdiv(rows, chunk_rows_eff)
    num_slices = max(1, min(int(num_slices), chunks_total))
    chunks_per_slice = _cdiv(chunks_total, num_slices)
    last_chunk = chunks_total - 1

    def _in_index_map(c, k, nvalid_ref, _cps=chunks_per_slice, _last=last_chunk):
        del nvalid_ref
        # Clamp dead blocks (uneven slice split) onto the last real chunk; the
        # in-kernel mask zeroes their contribution, and the DMA stays in bounds.
        return (jnp.minimum(c * _cps + k, _last), 0)

    def _out_index_map(c, k, nvalid_ref):
        del k, nvalid_ref
        return (c, 0)

    nvalid = jnp.asarray([B], dtype=jnp.int32)
    out_shape = jax.ShapeDtypeStruct((num_slices * acc_rows, LANES), jnp.float32)

    partials = pl.pallas_call(
        _mse_partial_kernel,
        out_shape=out_shape,
        grid_spec=pltpu.PrefetchScalarGridSpec(
            num_scalar_prefetch=1,
            grid=(num_slices, chunks_per_slice),
            in_specs=[
                pl.BlockSpec((chunk_rows_eff, LANES), _in_index_map),
                pl.BlockSpec((chunk_rows_eff, LANES), _in_index_map),
            ],
            out_specs=pl.BlockSpec((acc_rows, LANES), _out_index_map),
        ),
        compiler_params=pltpu.CompilerParams(
            dimension_semantics=("parallel", "arbitrary"),
        ),
        cost_estimate=pl.CostEstimate(
            flops=3 * B,
            transcendentals=0,
            bytes_accessed=B * (ip + ig) + num_slices * acc_rows * LANES * 4,
        ),
    )(nvalid, pred2d, gt2d)

    # Tiny XLA reduce of the per-slice vreg-shaped partials + true divide by N.
    return jnp.sum(partials) / jnp.float32(B)


if __name__ == "__main__":
    key = jax.random.PRNGKey(0)
    k1, k2, k3, k4, k5, k6 = jax.random.split(key, 6)

    # Case 1: tiny B=8 with pred shaped (B, 1) like a regression head; force the kernel path.
    B = 8
    pred = jax.random.normal(k1, (B, 1), dtype=jnp.float32)
    gt = jax.random.normal(k2, (B,), dtype=jnp.float32)
    loss = reg_loss(pred, gt, force_pallas=True)
    jax.block_until_ready(loss)
    ref = jnp.mean((jnp.squeeze(pred, axis=1) - gt) ** 2)
    assert jnp.allclose(loss, ref, rtol=1e-6, atol=1e-6), (loss, ref)

    # Case 2: lane-aligned B, small chunk, explicit 2-way "parallel" slice axis
    # (v7x dual-TensorCore path; on single-TC chips it is a serial outer loop).
    B2 = 4096
    pred2 = jax.random.normal(k3, (B2,), dtype=jnp.float32)
    gt2 = jax.random.normal(k4, (B2,), dtype=jnp.float32)
    loss2 = reg_loss(pred2, gt2, chunk_rows=8, num_slices=2, force_pallas=True)
    jax.block_until_ready(loss2)
    ref2 = jnp.mean((pred2 - gt2) ** 2)
    assert jnp.allclose(loss2, ref2, rtol=1e-5, atol=1e-6), (loss2, ref2)

    # Case 3: non-lane-aligned B -> boundary block + in-kernel tail masking.
    B3 = 1234
    pred3 = jax.random.normal(k5, (B3,), dtype=jnp.float32)
    gt3 = jax.random.normal(k6, (B3,), dtype=jnp.float32)
    loss3 = reg_loss(pred3, gt3, force_pallas=True)
    jax.block_until_ready(loss3)
    ref3 = jnp.mean((pred3 - gt3) ** 2)
    assert jnp.allclose(loss3, ref3, rtol=1e-5, atol=1e-6), (loss3, ref3)

    # Fast path (fused jnp) for small batches should also match.
    loss_fast = reg_loss(pred, gt)
    jax.block_until_ready(loss_fast)
    assert jnp.allclose(loss_fast, ref, rtol=1e-6, atol=1e-6), (loss_fast, ref)

    print("KERNEL_OK")
</pallas_src>

<mosaic_0001>
module attributes {stable_mosaic.version = 11 : i64} {
  func.func @_mse_partial_kernel(%arg0: i32, %arg1: i32, %arg2: memref<1xi32, #tpu.memory_space<smem>>, %arg3: memref<1x128xf32, #tpu.memory_space<vmem>>, %arg4: memref<1x128xf32, #tpu.memory_space<vmem>>, %arg5: memref<1x128xf32, #tpu.memory_space<vmem>>) attributes {dimension_semantics = [#tpu.dimension_semantics<parallel>, #tpu.dimension_semantics<arbitrary>], iteration_bounds = array<i64: 1, 1>, scalar_prefetch = 1 : i64, scratch_operands = 0 : i64, tpu.core_type = #tpu.core_type<tc>, window_params = [{transform_indices = @transform_0, window_bounds = array<i64: 1, 128>}, {transform_indices = @transform_1, window_bounds = array<i64: 1, 128>}, {transform_indices = @transform_2, window_bounds = array<i64: 1, 128>}]} {
    %c0_i32 = arith.constant 0 : i32
    %0 = arith.cmpi eq, %arg1, %c0_i32 : i32
    %1 = arith.extui %0 : i1 to i32
    %c0_i32_0 = arith.constant 0 : i32
    %2 = arith.cmpi ne, %1, %c0_i32_0 : i32
    scf.if %2 {
      %cst_11 = arith.constant 0.000000e+00 : f32
      %27 = vector.broadcast %cst_11 : f32 to vector<1x128xf32>
      %c0_12 = arith.constant 0 : index
      %c0_13 = arith.constant 0 : index
      %28 = vector.load %arg5[%c0_12, %c0_13] : memref<1x128xf32, #tpu.memory_space<vmem>>, vector<1x128xf32>
      tpu.vector_store %arg5[%c0_12, %c0_13], %27 {strides = array<i32>} : memref<1x128xf32, #tpu.memory_space<vmem>>, vector<1x128xf32>,
    } else {
    }
    %c1_i32 = arith.constant 1 : i32
    %3 = arith.muli %arg0, %c1_i32 : i32
    %4 = arith.addi %3, %arg1 : i32
    %c1_i32_1 = arith.constant 1 : i32
    %5 = arith.muli %4, %c1_i32_1 : i32
    %6 = tpu.iota {dimensions = array<i32: 0>} : vector<1x128xi32>
    %7 = tpu.iota {dimensions = array<i32: 1>} : vector<1x128xi32>
    %8 = vector.broadcast %5 : i32 to vector<1x128xi32>
    %9 = arith.addi %8, %6 : vector<1x128xi32>
    %c128_i32 = arith.constant 128 : i32
    %10 = vector.broadcast %c128_i32 : i32 to vector<1x128xi32>
    %11 = arith.muli %9, %10 : vector<1x128xi32>
    %12 = arith.addi %11, %7 : vector<1x128xi32>
    %c0 = arith.constant 0 : index
    %13 = memref.load %arg2[%c0] : memref<1xi32, #tpu.memory_space<smem>>
    %14 = vector.broadcast %13 : i32 to vector<1x128xi32>
    %15 = arith.cmpi slt, %12, %14 : vector<1x128xi32>
    %c0_2 = arith.constant 0 : index
    %c0_3 = arith.constant 0 : index
    %16 = vector.load %arg3[%c0_2, %c0_3] : memref<1x128xf32, #tpu.memory_space<vmem>>, vector<1x128xf32>
    %c0_4 = arith.constant 0 : index
    %c0_5 = arith.constant 0 : index
    %17 = vector.load %arg4[%c0_4, %c0_5] : memref<1x128xf32, #tpu.memory_space<vmem>>, vector<1x128xf32>
    %18 = arith.subf %16, %17 : vector<1x128xf32>
    %cst = arith.constant 0.000000e+00 : f32
    %19 = vector.broadcast %cst : f32 to vector<1x128xf32>
    %20 = arith.select %15, %18, %19 : vector<1x128xi1>, vector<1x128xf32>
    %21 = arith.mulf %20, %20 : vector<1x128xf32>
    %c0_6 = arith.constant 0 : index
    %c0_7 = arith.constant 0 : index
    %22 = vector.load %arg5[%c0_6, %c0_7] : memref<1x128xf32, #tpu.memory_space<vmem>>, vector<1x128xf32>
    %23 = vector.shape_cast %21 : vector<1x128xf32> to vector<1x1x128xf32>
    %cst_8 = arith.constant dense<0.000000e+00> : vector<1x128xf32>
    %24 = vector.multi_reduction <add>, %23, %cst_8 [0] : vector<1x1x128xf32> to vector<1x128xf32>
    %25 = arith.addf %22, %24 : vector<1x128xf32>
    %c0_9 = arith.constant 0 : index
    %c0_10 = arith.constant 0 : index
    %26 = vector.load %arg5[%c0_9, %c0_10] : memref<1x128xf32, #tpu.memory_space<vmem>>, vector<1x128xf32>
    tpu.vector_store %arg5[%c0_9, %c0_10], %25 {strides = array<i32>} : memref<1x128xf32, #tpu.memory_space<vmem>>, vector<1x128xf32>,
    return
  }
  func.func @transform_0(%arg0: i32, %arg1: i32, %arg2: memref<1xi32, #tpu.memory_space<smem>>) -> (i32, i32) {
    %c1_i32 = arith.constant 1 : i32
    %0 = arith.muli %arg0, %c1_i32 : i32
    %1 = arith.addi %0, %arg1 : i32
    %c0_i32 = arith.constant 0 : i32
    %2 = arith.minsi %1, %c0_i32 : i32
    %c0_i32_0 = arith.constant 0 : i32
    %c0_i32_1 = arith.constant 0 : i32
    return %2, %c0_i32_0 : i32, i32
  }
  func.func @transform_1(%arg0: i32, %arg1: i32, %arg2: memref<1xi32, #tpu.memory_space<smem>>) -> (i32, i32) {
    %c1_i32 = arith.constant 1 : i32
    %0 = arith.muli %arg0, %c1_i32 : i32
    %1 = arith.addi %0, %arg1 : i32
    %c0_i32 = arith.constant 0 : i32
    %2 = arith.minsi %1, %c0_i32 : i32
    %c0_i32_0 = arith.constant 0 : i32
    %c0_i32_1 = arith.constant 0 : i32
    return %2, %c0_i32_0 : i32, i32
  }
  func.func @transform_2(%arg0: i32, %arg1: i32, %arg2: memref<1xi32, #tpu.memory_space<smem>>) -> (i32, i32) {
    %c0_i32 = arith.constant 0 : i32
    %c0_i32_0 = arith.constant 0 : i32
    return %arg0, %c0_i32 : i32, i32
  }
}

</mosaic_0001>

<llo_original>
// kernel: tpu_custom_call.1
$region0: #{tpu_custom_call.1}
  #allocation0 [shape = 'u32[]', space=smem, size = 0x4, offset = 0x4, fixed_abs, tag = 'smem constant byte address 0x4 - core index']
  #allocation1 [shape = 'u32[144,128]{1,0:T(1,128)}', space=vmem, size = 0x12000, scoped, tag = 'internal scratch']
  #allocation2 [shape = 's32[1]{0}', space=sflag, size = 0x4, scoped, tag = 'scoped memory for tpu_custom_call.1']
  #allocation3 [shape = 's32[1]{0:T(128)S(6)}', space=smem, size = 0x200, scoped, tag = 'prefetched SMEM operand 0']
  %s0 = inlined_call_operand.<no memory space> [shape: s32[1], index: 0, kind: input, shape index: {}]
  %s1 = inlined_call_operand.vmem [shape: f32[1,128], index: 1, kind: input, shape index: {}]
  %s2 = inlined_call_operand.vmem [shape: f32[1,128], index: 2, kind: input, shape index: {}]
  %s3 = inlined_call_operand.hbm [shape: f32[1,128], index: 3, kind: output, shape index: {}]
  %s4 = sld [smem:[#allocation0]]
  $region22: #{tpu_custom_call.1} parent=0
    _
  %s6 = ssub.s32 1, %s4
  %s7 = scalar_select 0, %s6, %s4
  %8 = sst [smem:[#allocation3]] %s0
  $region1: #{tpu_custom_call.1} parent=0
    #allocation4 [shape = 'u8[512]{0}', space=vmem, size = 0x400, scoped, tag = 'output window, operand 0, single buffered']
    #allocation5 [shape = 's32[1]{0}', space=sflag, size = 0x4, scoped, tag = 'scoped memory for tpu_custom_call.1']
    %9 = vsyncpa [#allocation5], 0
    // Predicated region
    $region2: #{tpu_custom_call.1} parent=1 // pred_check
      _
    $region3: #{tpu_custom_call.1} parent=1 // pred_check_branch
      %11 = sbr.rel (0) target = $region5
    $region4: #{tpu_custom_call.1} parent=1 // pred_region
      %s12 = sadd.s32 0, 0
      %p13 = scmp.lt.s32.totalorder %s12, 0
      %s14 = scalar_select %p13, %s12, 0
      %p15 = scmp.lt.s32.totalorder %s14, 0
      %s16 = scalar_select %p15, %s14, 0
      %s17 = scalar_lea.vmem %s1, %s16
      %s18 = sadd.s32 0, 0
      %p19 = scmp.lt.s32.totalorder %s18, 0
      %s20 = scalar_select %p19, %s18, 0
    $region5: #{tpu_custom_call.1} parent=1 // pred_fallthru
      _
    // Predicated region
    $region6: #{tpu_custom_call.1} parent=1 // pred_check
      _
    $region7: #{tpu_custom_call.1} parent=1 // pred_check_branch
      %22 = sbr.rel (0) target = $region9
    $region8: #{tpu_custom_call.1} parent=1 // pred_region
      %s23 = sadd.s32 0, 0
      %p24 = scmp.lt.s32.totalorder %s23, 0
      %s25 = scalar_select %p24, %s23, 0
      %p26 = scmp.lt.s32.totalorder %s25, 0
      %s27 = scalar_select %p26, %s25, 0
      %s28 = scalar_lea.vmem %s2, %s27
      %s29 = sadd.s32 0, 0
      %p30 = scmp.lt.s32.totalorder %s29, 0
      %s31 = scalar_select %p30, %s29, 0
    $region9: #{tpu_custom_call.1} parent=1 // pred_fallthru
      _
    %s32 = sadd.s32 0, 0
    %p33 = scmp.lt.s32.totalorder %s32, 0
    %s34 = scalar_select %p33, %s32, 0
    %p35 = scmp.lt.s32.totalorder %s34, 0
    %s36 = scalar_select %p35, %s34, 0
    %s37 = scalar_lea.vmem %s1, %s36
    %s38 = sadd.s32 0, 0
    %p39 = scmp.lt.s32.totalorder %s38, 0
    %s40 = scalar_select %p39, %s38, 0
    %p41 = scmp.lt.s32.totalorder %s40, 0
    %s42 = scalar_select %p41, %s40, 0
    %s43 = scalar_lea.vmem %s2, %s42
    %s44 = sadd.s32 0, 0
    %p45 = scmp.lt.s32.totalorder %s44, 0
    %s46 = scalar_select %p45, %s44, 0
    %p47 = scmp.lt.s32.totalorder %s46, 0
    %s48 = scalar_select %p47, %s46, 0
    %s49 = scalar_lea.vmem %s1, %s48
    %s50 = sadd.s32 0, 0
    %p51 = scmp.lt.s32.totalorder %s50, 0
    %s52 = scalar_select %p51, %s50, 0
    %s53 = sadd.s32 0, 0
    %p54 = scmp.lt.s32.totalorder %s53, 0
    %s55 = scalar_select %p54, %s53, 0
    %p56 = scmp.lt.s32.totalorder %s55, 0
    %s57 = scalar_select %p56, %s55, 0
    %s58 = scalar_lea.vmem %s2, %s57
    %s59 = sadd.s32 0, 0
    %p60 = scmp.lt.s32.totalorder %s59, 0
    %s61 = scalar_select %p60, %s59, 0
    %p62 = scmp.eq.s32.totalorder 0, 0
    // Predicated region
    $region10: #{tpu_custom_call.1} parent=1 // pred_check
      %p63 = pneg %p62
    $region11: #{tpu_custom_call.1} parent=1 // pred_check_branch
      %65 = sbr.rel (%p63) target = $region13
    $region12: #{tpu_custom_call.1} parent=1 // pred_region
      %66 = vst [vmem:[#allocation4] sm:$0x1] 0.0
    $region13: #{tpu_custom_call.1} parent=1 // pred_fallthru
      _
    %s67 = sadd.s32 0, 0
    %v68 = vlaneseq
    %v69 = vshrl.u32 %v68, 7
    %v70 = vlaneseq
    %v71 = vand.u32 %v70, 127
    %v72 = vstv %s67
    %v73 = vadd.s32 %v72, %v69
    %v74 = vmul.u32 %v73, 128
    %v75 = vadd.s32 %v74, %v71
    %s76 = sld [smem:[#allocation3]]
    %v77 = vstv %s76
    %vm78 = vcmp.lt.s32.totalorder %v75, %v77
    %v79 = vld [vmem:[%s49] sm:$0x1]
    %v80 = vld [vmem:[%s58] sm:$0x1]
    %v81 = vsub.f32 %v79, %v80
    %v82 = vsel %vm78, %v81, 0.0
    %v83 = vmul.f32 %v82, %v82
    %v84 = vld [vmem:[#allocation4] sm:$0x1]
    %v85 = vadd.f32 %v83, 0.0
    %v86 = vadd.f32 %v84, %v85
    %87 = vst [vmem:[#allocation4] sm:$0x1] %v86
    // Predicated region
    $region14: #{tpu_custom_call.1} parent=1 // pred_check
      _
    $region15: #{tpu_custom_call.1} parent=1 // pred_check_branch
      %89 = sbr.rel (0) target = $region17
    $region16: #{tpu_custom_call.1} parent=1 // pred_region
      %s91 = ssub.s32 16, 16
      %92 = vsyncadd [#allocation5], %s91
      %s94 = sshll.u32 [#allocation4], 4
      %s95 = int_to_ptr.vmem [resolvable:$true] %s94
      %97 = dma.vmem_to_hbm [thread:$0]  %s95, 16, %s3, [#allocation5]
    $region17: #{tpu_custom_call.1} parent=1 // pred_fallthru
      _
    // Predicated region
    $region18: #{tpu_custom_call.1} parent=1 // pred_check
      _
    $region19: #{tpu_custom_call.1} parent=1 // pred_check_branch
      %99 = sbr.rel (0) target = $region21
    $region20: #{tpu_custom_call.1} parent=1 // pred_region
      %100 = dma.done [#allocation5], 16
    $region21: #{tpu_custom_call.1} parent=1 // pred_fallthru
      _
    %101 = vsyncpa [#allocation5], 1

</llo_original>
